<compile_context>
chip_gen: v6e
topology: v6e:2x2x1
jax: 0.10.0
libtpu: 0.0.40
codegen_flags: <defaults>
</compile_context>

<pallas_src>
import jax
import jax.numpy as jnp
from jax.experimental import pallas as pl
from jax.experimental.pallas import tpu as pltpu


def temporal_attention_kernel(x_ref, w_ref, o_ref):
    # x_ref : (Bt, T, D)  block of batch rows in VMEM
    # w_ref : (1, D)      lane-dense linear weight (bias omitted: softmax over
    #                     T is shift-invariant, so it cancels exactly)
    # o_ref : (Bt, D)     output tile
    x = x_ref[...].astype(jnp.float32)                          # (Bt, T, D)
    w = w_ref[...].reshape(1, 1, -1).astype(jnp.float32)        # (1, 1, D)

    # scores = <x, w> over the feature axis: VPU mul + XLU lane reduce (no MXU)
    scores = jnp.sum(x * w, axis=-1, keepdims=True)             # (Bt, T, 1)

    # Numerically-stable softmax over the time axis (PyTorch dim=1 == axis 1).
    m = jnp.max(scores, axis=1, keepdims=True)                  # (Bt, 1, 1)
    e = jnp.exp(scores - m)                                     # (Bt, T, 1)
    denom = jnp.sum(e, axis=1, keepdims=True)                   # (Bt, 1, 1)
    attn = e / denom                                            # exact divide

    # Weighted sum over time in f32, cast once at the store.
    out = jnp.sum(attn * x, axis=1)                             # (Bt, D) f32
    o_ref[...] = out.astype(o_ref.dtype)


def _round_up(n, m):
    return ((n + m - 1) // m) * m


def temporal_attention(x, weight, bias=None, *, block_b=None):
    """x: (B, T, D); weight: (1, D) (PyTorch nn.Linear layout); bias: (1,).

    The bias is accepted for API parity but unused: softmax over the time axis
    is invariant to adding a constant, so it never affects the output.
    Returns (B, D).
    """
    del bias  # mathematically redundant for this module's forward pass
    B, T, D = x.shape
    itemsize = jnp.dtype(x.dtype).itemsize

    if block_b is None:
        # Size the batch block so double-buffered input (2 * Bt*T*D bytes)
        # stays well under VMEM on every generation (v7x: 64 MiB per TC),
        # while keeping >= 2 grid steps when possible (v7x megacore).
        budget = 8 * 1024 * 1024                        # per x buffer
        block_b = max(8, (budget // max(1, T * D * itemsize)) // 8 * 8)
        b_pad8 = _round_up(B, 8)
        if b_pad8 >= 16:
            block_b = min(block_b, max(8, (b_pad8 // 2) // 8 * 8))
        block_b = min(block_b, b_pad8)

    # Pad batch to a multiple of the block size; padded rows are sliced off.
    B_pad = _round_up(B, block_b)
    if B_pad != B:
        x = jnp.pad(x, ((0, B_pad - B), (0, 0), (0, 0)))

    w = weight.reshape(1, D).astype(jnp.float32)        # lane-dense weight

    out = pl.pallas_call(
        temporal_attention_kernel,
        out_shape=jax.ShapeDtypeStruct((B_pad, D), x.dtype),
        grid_spec=pltpu.PrefetchScalarGridSpec(
            num_scalar_prefetch=0,
            grid=(B_pad // block_b,),
            in_specs=[
                pl.BlockSpec((block_b, T, D), lambda i: (i, 0, 0)),  # x block
                pl.BlockSpec((1, D), lambda i: (0, 0)),              # weight
            ],
            out_specs=pl.BlockSpec((block_b, D), lambda i: (i, 0)),
        ),
        compiler_params=pltpu.CompilerParams(
            dimension_semantics=("parallel",),           # batch blocks split
            vmem_limit_bytes=48 * 1024 * 1024,           # fits v7x's 64 MiB TC
        ),
    )(x, w)
    return out[:B]


def reference(x, weight, bias):
    # Pure JAX reference matching the PyTorch module exactly (bias included).
    scores = jnp.einsum("btd,od->bto", x, weight) + bias          # (B, T, 1)
    attn = jax.nn.softmax(scores, axis=1)
    return jnp.sum(attn * x, axis=1)                              # (B, D)


if __name__ == "__main__":
    key = jax.random.PRNGKey(0)
    B, T, D = 16, 8, 32                     # batch, seq (time), input_dim

    kx, kw, kb = jax.random.split(key, 3)
    x = jax.random.normal(kx, (B, T, D), dtype=jnp.float32)

    # Deterministic Linear(input_dim, 1) params (PyTorch-style uniform init).
    bound = 1.0 / (D ** 0.5)
    weight = jax.random.uniform(kw, (1, D), minval=-bound, maxval=bound,
                                dtype=jnp.float32)
    bias = jax.random.uniform(kb, (1,), minval=-bound, maxval=bound,
                              dtype=jnp.float32)

    out = temporal_attention(x, weight, bias)
    out = jax.block_until_ready(out)

    ref = reference(x, weight, bias)
    assert out.shape == (B, D)
    assert jnp.allclose(out, ref, atol=1e-3, rtol=1e-3), (
        f"max diff {jnp.max(jnp.abs(out - ref))}")

    print("KERNEL_OK")
</pallas_src>

<mosaic_0001>
module attributes {stable_mosaic.version = 11 : i64} {
  func.func @temporal_attention_kernel(%arg0: i32, %arg1: memref<8x8x32xf32, #tpu.memory_space<vmem>>, %arg2: memref<1x32xf32, #tpu.memory_space<vmem>>, %arg3: memref<8x32xf32, #tpu.memory_space<vmem>>) attributes {dimension_semantics = [#tpu.dimension_semantics<parallel>], iteration_bounds = array<i64: 2>, scalar_prefetch = 0 : i64, scratch_operands = 0 : i64, tpu.core_type = #tpu.core_type<tc>, window_params = [{transform_indices = @transform_0, window_bounds = array<i64: 8, 8, 32>}, {pipeline_mode = #tpu.pipeline_mode<synchronous>, transform_indices = @transform_1, window_bounds = array<i64: 1, 32>}, {transform_indices = @transform_2, window_bounds = array<i64: 8, 32>}]} {
    %c0 = arith.constant 0 : index
    %c0_0 = arith.constant 0 : index
    %c0_1 = arith.constant 0 : index
    %0 = vector.load %arg1[%c0, %c0_0, %c0_1] : memref<8x8x32xf32, #tpu.memory_space<vmem>>, vector<8x8x32xf32>
    %c0_2 = arith.constant 0 : index
    %c0_3 = arith.constant 0 : index
    %1 = vector.load %arg2[%c0_2, %c0_3] : memref<1x32xf32, #tpu.memory_space<vmem>>, vector<1x32xf32>
    %2 = vector.shape_cast %1 : vector<1x32xf32> to vector<1x1x32xf32>
    %3 = vector.broadcast %2 : vector<1x1x32xf32> to vector<8x8x32xf32>
    %4 = arith.mulf %0, %3 : vector<8x8x32xf32>
    %cst = arith.constant dense<0.000000e+00> : vector<8x8xf32>
    %5 = vector.multi_reduction <add>, %4, %cst [2] : vector<8x8x32xf32> to vector<8x8xf32>
    %6 = vector.shape_cast %5 : vector<8x8xf32> to vector<8x8x1xf32>
    %cst_4 = arith.constant dense<0xFF800000> : vector<8x1xf32>
    %7 = vector.multi_reduction <maximumf>, %6, %cst_4 [1] : vector<8x8x1xf32> to vector<8x1xf32>
    %8 = vector.shape_cast %7 : vector<8x1xf32> to vector<8x1x1xf32>
    %9 = vector.broadcast %8 : vector<8x1x1xf32> to vector<8x8x1xf32>
    %10 = arith.subf %6, %9 : vector<8x8x1xf32>
    %11 = math.exp %10 : vector<8x8x1xf32>
    %cst_5 = arith.constant dense<0.000000e+00> : vector<8x1xf32>
    %12 = vector.multi_reduction <add>, %11, %cst_5 [1] : vector<8x8x1xf32> to vector<8x1xf32>
    %13 = vector.shape_cast %12 : vector<8x1xf32> to vector<8x1x1xf32>
    %14 = vector.broadcast %13 : vector<8x1x1xf32> to vector<8x8x1xf32>
    %15 = arith.divf %11, %14 : vector<8x8x1xf32>
    %16 = vector.broadcast %15 : vector<8x8x1xf32> to vector<8x8x32xf32>
    %17 = arith.mulf %16, %0 : vector<8x8x32xf32>
    %cst_6 = arith.constant dense<0.000000e+00> : vector<8x32xf32>
    %18 = vector.multi_reduction <add>, %17, %cst_6 [1] : vector<8x8x32xf32> to vector<8x32xf32>
    %c0_7 = arith.constant 0 : index
    %c0_8 = arith.constant 0 : index
    %19 = vector.load %arg3[%c0_7, %c0_8] : memref<8x32xf32, #tpu.memory_space<vmem>>, vector<8x32xf32>
    tpu.vector_store %arg3[%c0_7, %c0_8], %18 {strides = array<i32>} : memref<8x32xf32, #tpu.memory_space<vmem>>, vector<8x32xf32>,
    return
  }
  func.func @transform_0(%arg0: i32) -> (i32, i32, i32) {
    %c0_i32 = arith.constant 0 : i32
    %c0_i32_0 = arith.constant 0 : i32
    %c0_i32_1 = arith.constant 0 : i32
    return %arg0, %c0_i32, %c0_i32_0 : i32, i32, i32
  }
  func.func @transform_1(%arg0: i32) -> (i32, i32) {
    %c0_i32 = arith.constant 0 : i32
    %c0_i32_0 = arith.constant 0 : i32
    %c0_i32_1 = arith.constant 0 : i32
    return %c0_i32, %c0_i32_0 : i32, i32
  }
  func.func @transform_2(%arg0: i32) -> (i32, i32) {
    %c0_i32 = arith.constant 0 : i32
    %c0_i32_0 = arith.constant 0 : i32
    return %arg0, %c0_i32 : i32, i32
  }
}

</mosaic_0001>

<llo_original>
// kernel: tpu_custom_call.1
$region0: #{tpu_custom_call.1}
  #allocation0 [shape = 'u32[]', space=smem, size = 0x4, offset = 0x4, fixed_abs, tag = 'smem constant byte address 0x4 - core index']
  #allocation1 [shape = 'u32[144,128]{1,0:T(1,128)}', space=vmem, size = 0x12000, scoped, tag = 'internal scratch']
  %s0 = inlined_call_operand.hbm [shape: f32[16,8,32], index: 0, kind: input, shape index: {}]
  %s1 = inlined_call_operand.vmem [shape: f32[1,32], index: 1, kind: input, shape index: {}]
  %s2 = inlined_call_operand.hbm [shape: f32[16,32], index: 2, kind: output, shape index: {}]
  %s3 = sld [smem:[#allocation0]]
  $region45: #{tpu_custom_call.1} parent=0
    _
  %s5 = ssub.s32 1, %s3
  %s6 = scalar_select 0, %s5, %s3
  $region1: #{tpu_custom_call.1} parent=0
    #allocation2 [shape = 'u8[65536]{0}', space=vmem, size = 0x10000, scoped, tag = 'input window, operand 0']
    #allocation3 [shape = 's32[2]{0}', space=sflag, size = 0x8, scoped, tag = 'scoped memory for tpu_custom_call.1']
    #allocation4 [shape = 's32[2]{0}', space=sflag, size = 0x8, scoped, tag = 'scoped memory for tpu_custom_call.1']
    #allocation5 [shape = 'u8[8192]{0}', space=vmem, size = 0x2000, scoped, tag = 'output window, operand 0']
    %7 = vsyncpa [#allocation3], 0
    %s8 = scalar_lea.sflag [#allocation3], 1
    %9 = vsyncpa %s8, 0
    %10 = vsyncpa [#allocation4], 0
    %s11 = scalar_lea.sflag [#allocation4], 1
    %12 = vsyncpa %s11, 0
    loop: start=0, step=1, limit=4
    $region2: #{tpu_custom_call.1} parent=1 // loop_pre_header
      _
    $region3: #{tpu_custom_call.1} parent=1 // loop_header
      %s14 = sphi 0, %s18
      %p15 = scmp.ge.s32.totalorder %s14, 4
      %s24 = sphi 0, %s26
      %s27 = sphi 0, %s24
      %s28 = sphi 0, %s27
      %s44 = sphi 0, %s28
      %s48 = sphi 0, %s48
      %s50 = sphi 0, %s48
      %s51 = sphi 0, %s50
      %s65 = sphi 0, %s51
      %s71 = sphi 0, %s73
      %s74 = sphi 0, %s71
      %s75 = sphi 0, %s74
      %s91 = sphi 0, %s75
    $region4: #{tpu_custom_call.1} parent=1 // loop_header_branch
      %17 = sbr.rel (%p15) target = $region8
    $region5: #{tpu_custom_call.1} parent=1 // loop_body
      %s19 = ssub.s32 %s14, 1
      %s20 = ssub.s32 %s14, 2
      %s21 = sadd.s32 %s14, 1
      %s22 = ssub.s32 %s14, %s21
      %p23 = scmp.eq.s32.totalorder %s22, 0
      %s25 = sadd.s32 %s24, 1
      %s26 = scalar_select %p23, %s24, %s25
      %p29 = pneg %p23
      %p30 = scmp.eq.s32.totalorder %s14, 1
      %p31 = por %p29, %p30
      %p32 = scmp.ne.s32.totalorder %s24, %s27
      %p33 = scmp.eq.s32.totalorder %s14, 0
      %p34 = por %p32, %p33
      %p35 = scmp.ne.s32.totalorder %s24, %s27
      %p36 = scmp.eq.s32.totalorder %s19, 1
      %p37 = por %p35, %p36
      %p38 = scmp.ne.s32.totalorder %s27, %s28
      %p39 = scmp.eq.s32.totalorder %s19, 0
      %p40 = por %p38, %p39
      %p41 = scmp.ne.s32.totalorder %s27, %s28
      %p42 = scmp.eq.s32.totalorder %s20, 1
      %p43 = por %p41, %p42
      %p45 = scmp.ne.s32.totalorder %s28, %s44
      %p46 = scmp.eq.s32.totalorder %s20, 0
      %p47 = por %p45, %p46
      %s49 = sadd.s32 %s48, 1
      %p52 = scmp.eq.s32.totalorder %s14, 1
      %p53 = scmp.ne.s32.totalorder %s48, %s50
      %p54 = scmp.eq.s32.totalorder %s14, 0
      %p55 = por %p53, %p54
      %p56 = scmp.ne.s32.totalorder %s48, %s50
      %p57 = scmp.eq.s32.totalorder %s19, 1
      %p58 = por %p56, %p57
      %p59 = scmp.ne.s32.totalorder %s50, %s51
      %p60 = scmp.eq.s32.totalorder %s19, 0
      %p61 = por %p59, %p60
      %p62 = scmp.ne.s32.totalorder %s50, %s51
      %p63 = scmp.eq.s32.totalorder %s20, 1
      %p64 = por %p62, %p63
      %p66 = scmp.ne.s32.totalorder %s51, %s65
      %p67 = scmp.eq.s32.totalorder %s20, 0
      %p68 = por %p66, %p67
      %s69 = ssub.s32 %s14, %s21
      %p70 = scmp.eq.s32.totalorder %s69, 0
      %s72 = sadd.s32 %s71, 1
      %s73 = scalar_select %p70, %s71, %s72
      %p76 = pneg %p70
      %p77 = scmp.eq.s32.totalorder %s14, 1
      %p78 = por %p76, %p77
      %p79 = scmp.ne.s32.totalorder %s71, %s74
      %p80 = scmp.eq.s32.totalorder %s14, 0
      %p81 = por %p79, %p80
      %p82 = scmp.ne.s32.totalorder %s71, %s74
      %p83 = scmp.eq.s32.totalorder %s19, 1
      %p84 = por %p82, %p83
      %p85 = scmp.ne.s32.totalorder %s74, %s75
      %p86 = scmp.eq.s32.totalorder %s19, 0
      %p87 = por %p85, %p86
      %p88 = scmp.ne.s32.totalorder %s74, %s75
      %p89 = scmp.eq.s32.totalorder %s20, 1
      %p90 = por %p88, %p89
      %p92 = scmp.ne.s32.totalorder %s75, %s91
      %p93 = scmp.eq.s32.totalorder %s20, 0
      %p94 = por %p92, %p93
      %p95 = scmp.le.s32.totalorder 1, %s14
      %p96 = scmp.lt.s32.totalorder %s14, 3
      %p97 = pnand %p95, %p96
      %p98 = pneg %p97
      // Predicated region
      $region9: #{tpu_custom_call.1} parent=5 // pred_check
        _
      $region10: #{tpu_custom_call.1} parent=5 // pred_check_branch
        %100 = sbr.rel (%p97) target = $region12
      $region11: #{tpu_custom_call.1} parent=5 // pred_region
        %s101 = ssub.s32 %s14, 1
        // Predicated region
        $region13: #{tpu_custom_call.1} parent=11 // pred_check
          %p102 = pneg %p61
        $region14: #{tpu_custom_call.1} parent=11 // pred_check_branch
          %104 = sbr.rel (%p102) target = $region16
        $region15: #{tpu_custom_call.1} parent=11 // pred_region
          _
        $region16: #{tpu_custom_call.1} parent=11 // pred_fallthru
          _
      $region12: #{tpu_custom_call.1} parent=5 // pred_fallthru
        _
      %p105 = scmp.lt.s32.totalorder %s14, 2
      // Predicated region
      $region17: #{tpu_custom_call.1} parent=5 // pred_check
        %p106 = pneg %p105
      $region18: #{tpu_custom_call.1} parent=5 // pred_check_branch
        %108 = sbr.rel (%p106) target = $region20
      $region19: #{tpu_custom_call.1} parent=5 // pred_region
        // Predicated region
        $region21: #{tpu_custom_call.1} parent=19 // pred_check
          %p109 = pneg %p34
        $region22: #{tpu_custom_call.1} parent=19 // pred_check_branch
          %111 = sbr.rel (%p109) target = $region24
        $region23: #{tpu_custom_call.1} parent=19 // pred_region
          %s112 = sand.u32 %s24, 1
          %s113 = scalar_lea.sflag [#allocation3], %s112
          %s114 = sand.u32 %s24, 1
          %s115 = smul.addr %s114, 64
          %s116 = scalar_lea.vmem [#allocation2], %s115
          %s117 = smul.u32 8, %s14
          %s119 = ssub.s32 1024, 1024
          %120 = vsyncadd %s113, %s119
          %s121 = smul.addr %s117, 128
          %s122 = scalar_lea.hbm %s0, %s121
          %s123 = sshll.u32 %s116, 4
          %s124 = int_to_ptr.vmem [resolvable:$true] %s123
          %129 = dma.hbm_to_vmem [thread:$0]  %s122, 1024, %s124, %s113, 128, 128, 8
        $region24: #{tpu_custom_call.1} parent=19 // pred_fallthru
          _
      $region20: #{tpu_custom_call.1} parent=5 // pred_fallthru
        _
      %p130 = scmp.le.s32.totalorder 1, %s14
      %p131 = scmp.lt.s32.totalorder %s14, 3
      %p132 = pnand %p130, %p131
      %p133 = pneg %p132
      // Predicated region
      $region25: #{tpu_custom_call.1} parent=5 // pred_check
        _
      $region26: #{tpu_custom_call.1} parent=5 // pred_check_branch
        %135 = sbr.rel (%p132) target = $region28
      $region27: #{tpu_custom_call.1} parent=5 // pred_region
        %s136 = ssub.s32 %s14, 1
        %s137 = sand.u32 %s27, 1
        %s138 = scalar_lea.sflag [#allocation3], %s137
        %s139 = sand.u32 %s27, 1
        %s140 = smul.addr %s139, 64
        %s141 = scalar_lea.vmem [#allocation2], %s140
        // Predicated region
        $region29: #{tpu_custom_call.1} parent=27 // pred_check
          %p142 = pneg %p40
        $region30: #{tpu_custom_call.1} parent=27 // pred_check_branch
          %144 = sbr.rel (%p142) target = $region32
        $region31: #{tpu_custom_call.1} parent=27 // pred_region
          %145 = dma.done %s138, 1024
        $region32: #{tpu_custom_call.1} parent=27 // pred_fallthru
          _
        %s146 = sand.u32 %s27, 1
        %s147 = scalar_lea.sflag [#allocation3], %s146
        %s148 = sand.u32 %s27, 1
        %s149 = smul.addr %s148, 64
        %s150 = scalar_lea.vmem [#allocation2], %s149
        %p151 = pneg %p40
        %p152 = pneg %p37
        %p153 = pneg %p61
        %p154 = pneg %p58
        %p155 = pneg %p87
        %p156 = pneg %p84
        %s157 = sand.u32 %s74, 1
        %s158 = scalar_lea.sflag [#allocation4], %s157
        %s159 = sand.u32 %s74, 1
        %s160 = smul.addr %s159, 8
        %s161 = scalar_lea.vmem [#allocation5], %s160
        %s162 = smul.u32 8, %s19
        %v163 = vld [vmem:[%s141] sm:$0xff]
        %v164 = vld [vmem:[%s141 + $0x8] sm:$0xff]
        %v165 = vld [vmem:[%s141 + $0x10] sm:$0xff]
        %v166 = vld [vmem:[%s141 + $0x18] sm:$0xff]
        %v167 = vld [vmem:[%s141 + $0x20] sm:$0xff]
        %v168 = vld [vmem:[%s141 + $0x28] sm:$0xff]
        %v169 = vld [vmem:[%s141 + $0x30] sm:$0xff]
        %v170 = vld [vmem:[%s141 + $0x38] sm:$0xff]
        %v171 = vld [vmem:[%s1] sm:$0x1]
        %v173 = vlaneseq
        %v174 = vshrl.u32 %v173, 7
        %v175 = vsub.s32 0, %v174
        %v176 = vrot.slane %v171, %v175
        %v178 = vmul.f32 %v163, %v176
        %v179 = vmul.f32 %v164, %v176
        %v180 = vmul.f32 %v165, %v176
        %v181 = vmul.f32 %v166, %v176
        %v182 = vmul.f32 %v167, %v176
        %v183 = vmul.f32 %v168, %v176
        %v184 = vmul.f32 %v169, %v176
        %v185 = vmul.f32 %v170, %v176
        %vm186 = vcmask 261120
        %v187 = vsel %vm186, %v178, 0.0
        %188 = vadd.xlane.f32.xlu0 %v187
        %v189 = vpop.xlane.xlu0 %188
        %v190 = vsel %vm186, %v179, 0.0
        %191 = vadd.xlane.f32.xlu0 %v190
        %v192 = vpop.xlane.xlu0 %191
        %v193 = vsel %vm186, %v180, 0.0
        %194 = vadd.xlane.f32.xlu0 %v193
        %v195 = vpop.xlane.xlu0 %194
        %v196 = vsel %vm186, %v181, 0.0
        %197 = vadd.xlane.f32.xlu0 %v196
        %v198 = vpop.xlane.xlu0 %197
        %v199 = vsel %vm186, %v182, 0.0
        %200 = vadd.xlane.f32.xlu0 %v199
        %v201 = vpop.xlane.xlu0 %200
        %v202 = vsel %vm186, %v183, 0.0
        %203 = vadd.xlane.f32.xlu0 %v202
        %v204 = vpop.xlane.xlu0 %203
        %v205 = vsel %vm186, %v184, 0.0
        %206 = vadd.xlane.f32.xlu0 %v205
        %v207 = vpop.xlane.xlu0 %206
        %v208 = vsel %vm186, %v185, 0.0
        %209 = vadd.xlane.f32.xlu0 %v208
        %v210 = vpop.xlane.xlu0 %209
        %v211 = vrot.slane %v189, 4
        %v212 = vmax.f32 %v189, %v211
        %v213 = vrot.slane %v212, 2
        %v214 = vmax.f32 %v212, %v213
        %v215 = vrot.slane %v214, 1
        %v216 = vmax.f32 %v214, %v215
        %v217 = vrot.slane %v192, 4
        %v218 = vmax.f32 %v192, %v217
        %v219 = vrot.slane %v218, 2
        %v220 = vmax.f32 %v218, %v219
        %v221 = vrot.slane %v220, 1
        %v222 = vmax.f32 %v220, %v221
        %v223 = vrot.slane %v195, 4
        %v224 = vmax.f32 %v195, %v223
        %v225 = vrot.slane %v224, 2
        %v226 = vmax.f32 %v224, %v225
        %v227 = vrot.slane %v226, 1
        %v228 = vmax.f32 %v226, %v227
        %v229 = vrot.slane %v198, 4
        %v230 = vmax.f32 %v198, %v229
        %v231 = vrot.slane %v230, 2
        %v232 = vmax.f32 %v230, %v231
        %v233 = vrot.slane %v232, 1
        %v234 = vmax.f32 %v232, %v233
        %v235 = vrot.slane %v201, 4
        %v236 = vmax.f32 %v201, %v235
        %v237 = vrot.slane %v236, 2
        %v238 = vmax.f32 %v236, %v237
        %v239 = vrot.slane %v238, 1
        %v240 = vmax.f32 %v238, %v239
        %v241 = vrot.slane %v204, 4
        %v242 = vmax.f32 %v204, %v241
        %v243 = vrot.slane %v242, 2
        %v244 = vmax.f32 %v242, %v243
        %v245 = vrot.slane %v244, 1
        %v246 = vmax.f32 %v244, %v245
        %v247 = vrot.slane %v207, 4
        %v248 = vmax.f32 %v207, %v247
        %v249 = vrot.slane %v248, 2
        %v250 = vmax.f32 %v248, %v249
        %v251 = vrot.slane %v250, 1
        %v252 = vmax.f32 %v250, %v251
        %v253 = vrot.slane %v210, 4
        %v254 = vmax.f32 %v210, %v253
        %v255 = vrot.slane %v254, 2
        %v256 = vmax.f32 %v254, %v255
        %v257 = vrot.slane %v256, 1
        %v258 = vmax.f32 %v256, %v257
        %v259 = vsub.f32 %v189, %v216
        %v260 = vsub.f32 %v192, %v222
        %v261 = vsub.f32 %v195, %v228
        %v262 = vsub.f32 %v198, %v234
        %v263 = vsub.f32 %v201, %v240
        %v264 = vsub.f32 %v204, %v246
        %v265 = vsub.f32 %v207, %v252
        %v266 = vsub.f32 %v210, %v258
        %v267 = vmul.f32 %v259, 1.442695
        %v268 = vpow.pop %v267
        %v269 = vmul.f32 %v260, 1.442695
        %v270 = vpow.pop %v269
        %v271 = vmul.f32 %v261, 1.442695
        %v272 = vpow.pop %v271
        %v273 = vmul.f32 %v262, 1.442695
        %v274 = vpow.pop %v273
        %v275 = vmul.f32 %v263, 1.442695
        %v276 = vpow.pop %v275
        %v277 = vmul.f32 %v264, 1.442695
        %v278 = vpow.pop %v277
        %v279 = vmul.f32 %v265, 1.442695
        %v280 = vpow.pop %v279
        %v281 = vmul.f32 %v266, 1.442695
        %v282 = vpow.pop %v281
        %v283 = vrot.slane %v268, 4
        %v284 = vadd.f32 %v268, %v283
        %v285 = vrot.slane %v284, 2
        %v286 = vadd.f32 %v284, %v285
        %v287 = vrot.slane %v286, 1
        %v288 = vadd.f32 %v286, %v287
        %v289 = vrot.slane %v270, 4
        %v290 = vadd.f32 %v270, %v289
        %v291 = vrot.slane %v290, 2
        %v292 = vadd.f32 %v290, %v291
        %v293 = vrot.slane %v292, 1
        %v294 = vadd.f32 %v292, %v293
        %v295 = vrot.slane %v272, 4
        %v296 = vadd.f32 %v272, %v295
        %v297 = vrot.slane %v296, 2
        %v298 = vadd.f32 %v296, %v297
        %v299 = vrot.slane %v298, 1
        %v300 = vadd.f32 %v298, %v299
        %v301 = vrot.slane %v274, 4
        %v302 = vadd.f32 %v274, %v301
        %v303 = vrot.slane %v302, 2
        %v304 = vadd.f32 %v302, %v303
        %v305 = vrot.slane %v304, 1
        %v306 = vadd.f32 %v304, %v305
        %v307 = vrot.slane %v276, 4
        %v308 = vadd.f32 %v276, %v307
        %v309 = vrot.slane %v308, 2
        %v310 = vadd.f32 %v308, %v309
        %v311 = vrot.slane %v310, 1
        %v312 = vadd.f32 %v310, %v311
        %v313 = vrot.slane %v278, 4
        %v314 = vadd.f32 %v278, %v313
        %v315 = vrot.slane %v314, 2
        %v316 = vadd.f32 %v314, %v315
        %v317 = vrot.slane %v316, 1
        %v318 = vadd.f32 %v316, %v317
        %v319 = vrot.slane %v280, 4
        %v320 = vadd.f32 %v280, %v319
        %v321 = vrot.slane %v320, 2
        %v322 = vadd.f32 %v320, %v321
        %v323 = vrot.slane %v322, 1
        %v324 = vadd.f32 %v322, %v323
        %v325 = vrot.slane %v282, 4
        %v326 = vadd.f32 %v282, %v325
        %v327 = vrot.slane %v326, 2
        %v328 = vadd.f32 %v326, %v327
        %v329 = vrot.slane %v328, 1
        %v330 = vadd.f32 %v328, %v329
        %v331 = vrcp.pop %v288
        %v332 = vmul.f32 %v268, %v331
        %v333 = vrcp.pop %v294
        %v334 = vmul.f32 %v270, %v333
        %v335 = vrcp.pop %v300
        %v336 = vmul.f32 %v272, %v335
        %v337 = vrcp.pop %v306
        %v338 = vmul.f32 %v274, %v337
        %v339 = vrcp.pop %v312
        %v340 = vmul.f32 %v276, %v339
        %v341 = vrcp.pop %v318
        %v342 = vmul.f32 %v278, %v341
        %v343 = vrcp.pop %v324
        %v344 = vmul.f32 %v280, %v343
        %v345 = vrcp.pop %v330
        %v346 = vmul.f32 %v282, %v345
        %v347 = vmul.f32 %v332, %v163
        %v348 = vmul.f32 %v334, %v164
        %v349 = vmul.f32 %v336, %v165
        %v350 = vmul.f32 %v338, %v166
        %v351 = vmul.f32 %v340, %v167
        %v352 = vmul.f32 %v342, %v168
        %v353 = vmul.f32 %v344, %v169
        %v354 = vmul.f32 %v346, %v170
        %v355 = vsel %vm186, %v347, 0.0
        %v356 = vrot.slane %v355, 4
        %v357 = vadd.f32 %v355, %v356
        %v358 = vrot.slane %v357, 2
        %v359 = vadd.f32 %v357, %v358
        %v360 = vrot.slane %v359, 1
        %v361 = vadd.f32 %v359, %v360
        %v362 = vsel %vm186, %v348, 0.0
        %v363 = vrot.slane %v362, 4
        %v364 = vadd.f32 %v362, %v363
        %v365 = vrot.slane %v364, 2
        %v366 = vadd.f32 %v364, %v365
        %v367 = vrot.slane %v366, 1
        %v368 = vadd.f32 %v366, %v367
        %v369 = vsel %vm186, %v349, 0.0
        %v370 = vrot.slane %v369, 4
        %v371 = vadd.f32 %v369, %v370
        %v372 = vrot.slane %v371, 2
        %v373 = vadd.f32 %v371, %v372
        %v374 = vrot.slane %v373, 1
        %v375 = vadd.f32 %v373, %v374
        %v376 = vsel %vm186, %v350, 0.0
        %v377 = vrot.slane %v376, 4
        %v378 = vadd.f32 %v376, %v377
        %v379 = vrot.slane %v378, 2
        %v380 = vadd.f32 %v378, %v379
        %v381 = vrot.slane %v380, 1
        %v382 = vadd.f32 %v380, %v381
        %v383 = vsel %vm186, %v351, 0.0
        %v384 = vrot.slane %v383, 4
        %v385 = vadd.f32 %v383, %v384
        %v386 = vrot.slane %v385, 2
        %v387 = vadd.f32 %v385, %v386
        %v388 = vrot.slane %v387, 1
        %v389 = vadd.f32 %v387, %v388
        %v390 = vsel %vm186, %v352, 0.0
        %v391 = vrot.slane %v390, 4
        %v392 = vadd.f32 %v390, %v391
        %v393 = vrot.slane %v392, 2
        %v394 = vadd.f32 %v392, %v393
        %v395 = vrot.slane %v394, 1
        %v396 = vadd.f32 %v394, %v395
        %v397 = vsel %vm186, %v353, 0.0
        %v398 = vrot.slane %v397, 4
        %v399 = vadd.f32 %v397, %v398
        %v400 = vrot.slane %v399, 2
        %v401 = vadd.f32 %v399, %v400
        %v402 = vrot.slane %v401, 1
        %v403 = vadd.f32 %v401, %v402
        %v404 = vsel %vm186, %v354, 0.0
        %v405 = vrot.slane %v404, 4
        %v406 = vadd.f32 %v404, %v405
        %v407 = vrot.slane %v406, 2
        %v408 = vadd.f32 %v406, %v407
        %v409 = vrot.slane %v408, 1
        %v410 = vadd.f32 %v408, %v409
        %vm419 = vcmask 1041409
        %v420 = vsel %vm419, %v368, %v361
        %vm421 = vcmask 1042434
        %v422 = vsel %vm421, %v375, %v420
        %vm423 = vcmask 1043459
        %v424 = vsel %vm423, %v382, %v422
        %vm425 = vcmask 1044484
        %v426 = vsel %vm425, %v389, %v424
        %vm427 = vcmask 1045509
        %v428 = vsel %vm427, %v396, %v426
        %vm429 = vcmask 1046534
        %v430 = vsel %vm429, %v403, %v428
        %vm431 = vcmask 1047559
        %v432 = vsel %vm431, %v410, %v430
        %434 = vst.msk [vmem:[%s161] sm:$0xff] %vm186, %v432
        %s435 = sand.u32 %s74, 1
        %s436 = scalar_lea.sflag [#allocation4], %s435
        %s437 = sand.u32 %s74, 1
        %s438 = smul.addr %s437, 8
        %s439 = scalar_lea.vmem [#allocation5], %s438
        // Predicated region
        $region33: #{tpu_custom_call.1} parent=27 // pred_check
          %p440 = pneg %p84
        $region34: #{tpu_custom_call.1} parent=27 // pred_check_branch
          %442 = sbr.rel (%p440) target = $region36
        $region35: #{tpu_custom_call.1} parent=27 // pred_region
          %s444 = ssub.s32 128, 128
          %445 = vsyncadd %s436, %s444
          %s446 = smul.addr %s19, 128
          %s447 = scalar_lea.hbm %s2, %s446
          %s449 = sshll.u32 %s439, 4
          %s450 = int_to_ptr.vmem [resolvable:$true] %s449
          %452 = dma.vmem_to_hbm [thread:$0]  %s450, 128, %s447, %s436
        $region36: #{tpu_custom_call.1} parent=27 // pred_fallthru
          _
      $region28: #{tpu_custom_call.1} parent=5 // pred_fallthru
        _
      %p453 = scmp.le.s32.totalorder 2, %s14
      // Predicated region
      $region37: #{tpu_custom_call.1} parent=5 // pred_check
        %p454 = pneg %p453
      $region38: #{tpu_custom_call.1} parent=5 // pred_check_branch
        %456 = sbr.rel (%p454) target = $region40
      $region39: #{tpu_custom_call.1} parent=5 // pred_region
        %s457 = ssub.s32 %s14, 2
        // Predicated region
        $region41: #{tpu_custom_call.1} parent=39 // pred_check
          %p458 = pneg %p90
        $region42: #{tpu_custom_call.1} parent=39 // pred_check_branch
          %460 = sbr.rel (%p458) target = $region44
        $region43: #{tpu_custom_call.1} parent=39 // pred_region
          %s461 = sand.u32 %s75, 1
          %s462 = scalar_lea.sflag [#allocation4], %s461
          %s463 = sand.u32 %s75, 1
          %s464 = smul.addr %s463, 8
          %s465 = scalar_lea.vmem [#allocation5], %s464
          %466 = dma.done %s462, 128
        $region44: #{tpu_custom_call.1} parent=39 // pred_fallthru
          _
      $region40: #{tpu_custom_call.1} parent=5 // pred_fallthru
        _
    $region6: #{tpu_custom_call.1} parent=1 // loop_footer
      %s18 = sadd.s32 1, %s14
    $region7: #{tpu_custom_call.1} parent=1 // loop_footer_branch
      %13 = sbr.rel target = $region3
    $region8: #{tpu_custom_call.1} parent=1 // loop_exit
      _
    %467 = vsyncpa [#allocation3], 1
    %s468 = scalar_lea.sflag [#allocation3], 1
    %469 = vsyncpa %s468, 1
    %470 = vsyncpa [#allocation4], 1
    %s471 = scalar_lea.sflag [#allocation4], 1
    %472 = vsyncpa %s471, 1

</llo_original>
